<compile_context>
chip_gen: v5e
topology: v5e:2x2
jax: 0.10.0
libtpu: 0.0.40
codegen_flags: <defaults>
</compile_context>

<pallas_src>
import functools

import jax
import jax.numpy as jnp
from jax import lax
from jax.experimental import pallas as pl
from jax.experimental.pallas import tpu as pltpu


def _round_up(v, m):
    return (v + m - 1) // m * m


def _pick_tile(dim_aligned, align, cap):
    """Largest multiple of `align` that divides `dim_aligned` and is <= cap."""
    base = dim_aligned // align
    max_d = max(1, min(base, cap // align))
    for d in range(max_d, 0, -1):
        if base % d == 0:
            return d * align
    return align


@functools.lru_cache(maxsize=1)
def _tpu_budget():
    """(TM_MAX, TN_MAX, TK_MAX, vmem_limit_bytes) for the local TPU generation."""
    vmem_cap = 64 << 20  # conservative default (v7x-sized)
    try:
        info = pltpu.get_tpu_info()
        vmem_cap = int(getattr(info, "vmem_capacity_bytes", vmem_cap) or vmem_cap)
    except Exception:
        pass
    if vmem_cap >= (100 << 20):      # v5e / v6e: 128 MiB VMEM
        return 512, 512, 2048, 64 << 20
    else:                            # v7x: 64 MiB VMEM per TensorCore
        return 512, 512, 1024, 48 << 20


def _contract(x, w):
    # x: (tm, tk), w: (tn, tk) -> (tm, tn); contract the last dims of both so
    # the PyTorch (out, in) weight layout feeds the MXU with no relayout.
    return lax.dot_general(
        x, w,
        dimension_numbers=(((1,), (1,)), ((), ())),
        preferred_element_type=jnp.float32,
    )


def _linear_single_block_kernel(x_ref, w_ref, b_ref, o_ref):
    acc = _contract(x_ref[...], w_ref[...])
    o_ref[...] = (acc + b_ref[...]).astype(o_ref.dtype)


def _linear_tiled_kernel_f32out(x_ref, w_ref, b_ref, o_ref):
    # f32 output: accumulate directly into the resident output block,
    # bias fused into the first K step. No scratch, no final copy.
    k = pl.program_id(2)
    partial = _contract(x_ref[...], w_ref[...])

    @pl.when(k == 0)
    def _():
        o_ref[...] = partial + b_ref[...]

    @pl.when(k > 0)
    def _():
        o_ref[...] += partial


def _linear_tiled_kernel(x_ref, w_ref, b_ref, o_ref, acc_ref):
    # Non-f32 output: f32 scratch accumulator; last partial product and bias
    # are fused into the epilogue store (no extra acc store+load on last step).
    k = pl.program_id(2)
    nk = pl.num_programs(2)
    partial = _contract(x_ref[...], w_ref[...])

    @pl.when(k == 0)
    def _():
        acc_ref[...] = jnp.zeros_like(acc_ref)

    @pl.when(k < nk - 1)
    def _():
        acc_ref[...] += partial

    @pl.when(k == nk - 1)
    def _():
        o_ref[...] = (acc_ref[...] + partial + b_ref[...]).astype(o_ref.dtype)


def linear_forward(x, weight, bias, *, compute_dtype="auto"):
    """nn.Linear forward. x: (..., D_in), weight: (D_out, D_in), bias: (D_out,)."""
    out_dtype = x.dtype
    lead = x.shape[:-1]
    K = x.shape[-1]
    N = weight.shape[0]
    x = x.reshape(-1, K)
    B = x.shape[0]

    if compute_dtype == "auto":
        # bf16 inputs + f32 accumulation hit the native MXU path and halve
        # x/W HBM traffic; keep f32 compute for small K.
        compute_dtype = jnp.bfloat16 if K >= 512 else None
    if compute_dtype is not None:
        x = x.astype(compute_dtype)
        weight = weight.astype(compute_dtype)

    sub = 8 if x.dtype == jnp.float32 else 16  # sublane multiple for compute dtype
    TM_MAX, TN_MAX, TK_MAX, vmem_limit = _tpu_budget()

    # Pad only to (sublane, 128) alignment; tiles are chosen as divisors of the
    # aligned dims so no further padding (and no extra HBM pad pass) is needed.
    Bp = _round_up(B, sub)
    Np = _round_up(N, 128)
    Kp = _round_up(K, 128)

    tm = _pick_tile(Bp, sub, TM_MAX)
    tn = _pick_tile(Np, 128, TN_MAX)
    tk = _pick_tile(Kp, 128, TK_MAX)

    # Megacore (v7x): keep >= 2 blocks on a parallel axis when both would
    # otherwise collapse to a single block. Harmless on single-TC parts.
    if Bp // tm == 1 and Np // tn == 1:
        if Bp >= 256 and Bp % (2 * sub) == 0:
            tm = Bp // 2
        elif Np >= 256 and Np % 256 == 0:
            tn = Np // 2

    xp = x if (Bp == B and Kp == K) else jnp.pad(x, ((0, Bp - B), (0, Kp - K)))
    wp = weight if (Np == N and Kp == K) else jnp.pad(weight, ((0, Np - N), (0, Kp - K)))
    bp = bias.astype(jnp.float32).reshape(1, N)
    if Np != N:
        bp = jnp.pad(bp, ((0, 0), (0, Np - N)))

    grid = (Bp // tm, Np // tn, Kp // tk)

    if grid == (1, 1, 1):
        # Tiny problem: single full-extent block, no grid machinery.
        out_p = pl.pallas_call(
            _linear_single_block_kernel,
            out_shape=jax.ShapeDtypeStruct((Bp, Np), out_dtype),
            compiler_params=pltpu.CompilerParams(vmem_limit_bytes=vmem_limit),
        )(xp, wp, bp)
    else:
        if out_dtype == jnp.float32:
            kernel = _linear_tiled_kernel_f32out
            scratch = []
        else:
            kernel = _linear_tiled_kernel
            scratch = [pltpu.VMEM((tm, tn), jnp.float32)]
        out_p = pl.pallas_call(
            kernel,
            out_shape=jax.ShapeDtypeStruct((Bp, Np), out_dtype),
            grid_spec=pltpu.PrefetchScalarGridSpec(
                num_scalar_prefetch=0,
                grid=grid,
                in_specs=[
                    pl.BlockSpec((tm, tk), lambda i, j, k: (i, k)),
                    pl.BlockSpec((tn, tk), lambda i, j, k: (j, k)),
                    # Bias block is constant in k -> not re-DMA'd every K step.
                    pl.BlockSpec((1, tn), lambda i, j, k: (0, j)),
                ],
                out_specs=pl.BlockSpec((tm, tn), lambda i, j, k: (i, j)),
                scratch_shapes=scratch,
            ),
            compiler_params=pltpu.CompilerParams(
                dimension_semantics=("parallel", "parallel", "arbitrary"),
                vmem_limit_bytes=vmem_limit,
            ),
        )(xp, wp, bp)

    out = out_p if (Bp == B and Np == N) else out_p[:B, :N]
    return out.astype(out_dtype).reshape(*lead, N)


if __name__ == "__main__":
    key = jax.random.PRNGKey(0)
    kx, kw, kb, kx2, kw2, kb2, kx3, kw3, kb3 = jax.random.split(key, 9)

    # --- 1) Small shape implied by the module (gridless single-block, f32) ---
    batch, input_dim, output_dim = 8, 32, 16
    x = jax.random.normal(kx, (batch, input_dim), dtype=jnp.float32)
    bound = 1.0 / jnp.sqrt(jnp.float32(input_dim))
    weight = jax.random.uniform(
        kw, (output_dim, input_dim), minval=-bound, maxval=bound, dtype=jnp.float32
    )
    bias = jax.random.uniform(
        kb, (output_dim,), minval=-bound, maxval=bound, dtype=jnp.float32
    )

    out = linear_forward(x, weight, bias)
    jax.block_until_ready(out)
    ref = x @ weight.T + bias
    assert out.shape == (batch, output_dim)
    assert jnp.allclose(out, ref, atol=1e-4, rtol=1e-4), "small f32 path mismatch"

    # --- 2) Tiled path, f32 in/out, auto-bf16 compute, multi-K-step, N pad ---
    Bb, Kb, Nb = 512, 4096, 384
    xb = jax.random.normal(kx2, (Bb, Kb), dtype=jnp.float32)
    bnd = 1.0 / jnp.sqrt(jnp.float32(Kb))
    wb = jax.random.uniform(kw2, (Nb, Kb), minval=-bnd, maxval=bnd, dtype=jnp.float32)
    bb = jax.random.uniform(kb2, (Nb,), minval=-bnd, maxval=bnd, dtype=jnp.float32)

    out_b = linear_forward(xb, wb, bb)  # auto -> bf16 compute, f32 accumulate
    jax.block_until_ready(out_b)
    ref_b = jnp.dot(
        xb.astype(jnp.bfloat16), wb.astype(jnp.bfloat16).T,
        preferred_element_type=jnp.float32,
    ) + bb
    assert out_b.shape == (Bb, Nb)
    assert jnp.allclose(out_b, ref_b, atol=1e-2, rtol=1e-2), "tiled f32-out path mismatch"

    # --- 3) Tiled path, bf16 in/out (scratch-accumulator kernel) ---
    Bc, Kc, Nc = 256, 4096, 256
    xc = jax.random.normal(kx3, (Bc, Kc), dtype=jnp.float32).astype(jnp.bfloat16)
    bndc = 1.0 / jnp.sqrt(jnp.float32(Kc))
    wc = jax.random.uniform(kw3, (Nc, Kc), minval=-bndc, maxval=bndc,
                            dtype=jnp.float32).astype(jnp.bfloat16)
    bc = jax.random.uniform(kb3, (Nc,), minval=-bndc, maxval=bndc,
                            dtype=jnp.float32).astype(jnp.bfloat16)

    out_c = linear_forward(xc, wc, bc)
    jax.block_until_ready(out_c)
    ref_c = (jnp.dot(xc, wc.T, preferred_element_type=jnp.float32)
             + bc.astype(jnp.float32)).astype(jnp.bfloat16)
    assert out_c.shape == (Bc, Nc) and out_c.dtype == jnp.bfloat16
    assert jnp.allclose(out_c.astype(jnp.float32), ref_c.astype(jnp.float32),
                        atol=2e-2, rtol=2e-2), "tiled bf16-out path mismatch"

    print("KERNEL_OK")
</pallas_src>

<mosaic_0001>
module attributes {stable_mosaic.version = 11 : i64} {
  func.func @_linear_single_block_kernel(%arg0: memref<8x128xf32, #tpu.memory_space<vmem>>, %arg1: memref<128x128xf32, #tpu.memory_space<vmem>>, %arg2: memref<1x128xf32, #tpu.memory_space<vmem>>, %arg3: memref<8x128xf32, #tpu.memory_space<vmem>>) attributes {dimension_semantics = [], scalar_prefetch = 0 : i64, scratch_operands = 0 : i64, tpu.core_type = #tpu.core_type<tc>} {
    %c0 = arith.constant 0 : index
    %c0_0 = arith.constant 0 : index
    %0 = vector.load %arg0[%c0, %c0_0] : memref<8x128xf32, #tpu.memory_space<vmem>>, vector<8x128xf32>
    %c0_1 = arith.constant 0 : index
    %c0_2 = arith.constant 0 : index
    %1 = vector.load %arg1[%c0_1, %c0_2] : memref<128x128xf32, #tpu.memory_space<vmem>>, vector<128x128xf32>
    %cst = arith.constant dense<0.000000e+00> : vector<8x128xf32>
    %2 = tpu.matmul %0, %1, %cst {dimension_numbers = #tpu.dot_dimension_numbers<[1], [1], [0], [0], [0, 0, 1, 0], [], []>} : vector<8x128xf32>, vector<128x128xf32>, vector<8x128xf32> -> vector<8x128xf32>
    %c0_3 = arith.constant 0 : index
    %c0_4 = arith.constant 0 : index
    %3 = vector.load %arg2[%c0_3, %c0_4] : memref<1x128xf32, #tpu.memory_space<vmem>>, vector<1x128xf32>
    %4 = vector.broadcast %3 : vector<1x128xf32> to vector<8x128xf32>
    %5 = arith.addf %2, %4 : vector<8x128xf32>
    %c0_5 = arith.constant 0 : index
    %c0_6 = arith.constant 0 : index
    %6 = vector.load %arg3[%c0_5, %c0_6] : memref<8x128xf32, #tpu.memory_space<vmem>>, vector<8x128xf32>
    tpu.vector_store %arg3[%c0_5, %c0_6], %5 {strides = array<i32>} : memref<8x128xf32, #tpu.memory_space<vmem>>, vector<8x128xf32>,
    return
  }
}

</mosaic_0001>

<llo_original>
// kernel: tpu_custom_call.1
$region0: #{tpu_custom_call.1}
  #allocation0 [shape = 'u32[]', space=smem, size = 0x4, offset = 0x4, fixed_abs, tag = 'smem constant byte address 0x4 - core index']
  #allocation1 [shape = 'u32[72,128]{1,0:T(1,128)}', space=vmem, size = 0x9000, scoped, tag = 'internal scratch']
  %s0 = inlined_call_operand.hbm [shape: f32[8,128], index: 0, kind: input, shape index: {}]
  %s1 = inlined_call_operand.hbm [shape: f32[128,128], index: 1, kind: input, shape index: {}]
  %s2 = inlined_call_operand.vmem [shape: f32[1,128], index: 2, kind: input, shape index: {}]
  %s3 = inlined_call_operand.hbm [shape: f32[8,128], index: 3, kind: output, shape index: {}]
  %s4 = sld [smem:[#allocation0]]
  $region30: #{tpu_custom_call.1} parent=0
    _
  %s6 = ssub.s32 1, %s4
  %s7 = scalar_select 0, %s6, %s4
  $region1: #{tpu_custom_call.1} parent=0
    #allocation2 [shape = 'u8[4096]{0}', space=vmem, size = 0x1000, scoped, tag = 'input window, operand 0, single buffered']
    #allocation3 [shape = 's32[1]{0}', space=sflag, size = 0x4, scoped, tag = 'scoped memory for tpu_custom_call.1']
    #allocation4 [shape = 's32[1]{0}', space=sflag, size = 0x4, scoped, tag = 'scoped memory for tpu_custom_call.1']
    #allocation5 [shape = 'u8[65536]{0}', space=vmem, size = 0x10000, scoped, tag = 'input window, operand 1, single buffered']
    #allocation6 [shape = 's32[1]{0}', space=sflag, size = 0x4, scoped, tag = 'scoped memory for tpu_custom_call.1']
    #allocation7 [shape = 'u8[4096]{0}', space=vmem, size = 0x1000, scoped, tag = 'output window, operand 0, single buffered']
    %8 = vsyncpa [#allocation3], 0
    %9 = vsyncpa [#allocation6], 0
    %10 = vsyncpa [#allocation4], 0
    // Predicated region
    $region2: #{tpu_custom_call.1} parent=1 // pred_check
      _
    $region3: #{tpu_custom_call.1} parent=1 // pred_check_branch
      %12 = sbr.rel (0) target = $region5
    $region4: #{tpu_custom_call.1} parent=1 // pred_region
      %14 = vsyncadd [#allocation3], 0
      %s16 = sshll.u32 %s0, 4
      %s17 = int_to_ptr.hbm [resolvable:$true] %s16
      %s18 = sshll.u32 [#allocation2], 4
      %s19 = int_to_ptr.vmem [resolvable:$true] %s18
      %21 = dma.hbm_to_vmem [thread:$0]  %s17, 128, %s19, [#allocation3]
    $region5: #{tpu_custom_call.1} parent=1 // pred_fallthru
      _
    // Predicated region
    $region6: #{tpu_custom_call.1} parent=1 // pred_check
      _
    $region7: #{tpu_custom_call.1} parent=1 // pred_check_branch
      %23 = sbr.rel (0) target = $region9
    $region8: #{tpu_custom_call.1} parent=1 // pred_region
      %25 = vsyncadd [#allocation6], 0
      %s26 = sshll.u32 %s1, 4
      %s27 = int_to_ptr.hbm [resolvable:$true] %s26
      %s28 = sshll.u32 [#allocation5], 4
      %s29 = int_to_ptr.vmem [resolvable:$true] %s28
      %34 = dma.hbm_to_vmem [thread:$0]  %s27, 2048, %s29, [#allocation6], 128, 128, 8
    $region9: #{tpu_custom_call.1} parent=1 // pred_fallthru
      _
    // Predicated region
    $region10: #{tpu_custom_call.1} parent=1 // pred_check
      _
    $region11: #{tpu_custom_call.1} parent=1 // pred_check_branch
      %36 = sbr.rel (0) target = $region13
    $region12: #{tpu_custom_call.1} parent=1 // pred_region
      _
    $region13: #{tpu_custom_call.1} parent=1 // pred_fallthru
      _
    // Predicated region
    $region14: #{tpu_custom_call.1} parent=1 // pred_check
      _
    $region15: #{tpu_custom_call.1} parent=1 // pred_check_branch
      %38 = sbr.rel (0) target = $region17
    $region16: #{tpu_custom_call.1} parent=1 // pred_region
      %40 = dma.done [#allocation3], 128
    $region17: #{tpu_custom_call.1} parent=1 // pred_fallthru
      _
    // Predicated region
    $region18: #{tpu_custom_call.1} parent=1 // pred_check
      _
    $region19: #{tpu_custom_call.1} parent=1 // pred_check_branch
      %42 = sbr.rel (0) target = $region21
    $region20: #{tpu_custom_call.1} parent=1 // pred_region
      %44 = dma.done [#allocation6], 2048
    $region21: #{tpu_custom_call.1} parent=1 // pred_fallthru
      _
    %v45 = vld [vmem:[#allocation2] sm:$0xff]
    %v46 = vld [vmem:[#allocation5] sm:$0xff]
    %v47 = vld [vmem:[#allocation5 + $0x8] sm:$0xff]
    %v48 = vld [vmem:[#allocation5 + $0x10] sm:$0xff]
    %v49 = vld [vmem:[#allocation5 + $0x18] sm:$0xff]
    %v50 = vld [vmem:[#allocation5 + $0x20] sm:$0xff]
    %v51 = vld [vmem:[#allocation5 + $0x28] sm:$0xff]
    %v52 = vld [vmem:[#allocation5 + $0x30] sm:$0xff]
    %v53 = vld [vmem:[#allocation5 + $0x38] sm:$0xff]
    %v54 = vld [vmem:[#allocation5 + $0x40] sm:$0xff]
    %v55 = vld [vmem:[#allocation5 + $0x48] sm:$0xff]
    %v56 = vld [vmem:[#allocation5 + $0x50] sm:$0xff]
    %v57 = vld [vmem:[#allocation5 + $0x58] sm:$0xff]
    %v58 = vld [vmem:[#allocation5 + $0x60] sm:$0xff]
    %v59 = vld [vmem:[#allocation5 + $0x68] sm:$0xff]
    %v60 = vld [vmem:[#allocation5 + $0x70] sm:$0xff]
    %v61 = vld [vmem:[#allocation5 + $0x78] sm:$0xff]
    %v62 = vld [vmem:[%s2] sm:$0x1]
    %v64 = vperm.slane %v62, 0
    %66 = vmatpush.xpose.msra.mxu0 %v61
    %67 = vmatpush.xpose.msra.mxu0 %v60
    %68 = vmatpush.xpose.msra.mxu0 %v59
    %69 = vmatpush.xpose.msra.mxu0 %v58
    %70 = vmatpush.xpose.msra.mxu0 %v57
    %71 = vmatpush.xpose.msra.mxu0 %v56
    %72 = vmatpush.xpose.msra.mxu0 %v55
    %73 = vmatpush.xpose.msra.mxu0 %v54
    %74 = vmatpush.xpose.msra.mxu0 %v53
    %75 = vmatpush.xpose.msra.mxu0 %v52
    %76 = vmatpush.xpose.msra.mxu0 %v51
    %77 = vmatpush.xpose.msra.mxu0 %v50
    %78 = vmatpush.xpose.msra.mxu0 %v49
    %79 = vmatpush.xpose.msra.mxu0 %v48
    %80 = vmatpush.xpose.msra.mxu0 %v47
    %81 = vmatpush.xpose.msra.mxu0 %v46
    %82 = vmatmul.f32.gmra.mxu0 %v45
    %v83 = vpop.f32.mrf.mxu0
    %v84 = vadd.f32 %v64, %v83
    %85 = vdwg.mxu0
    %86 = vst [vmem:[#allocation7] sm:$0xff] %v84
    // Predicated region
    $region22: #{tpu_custom_call.1} parent=1 // pred_check
      _
    $region23: #{tpu_custom_call.1} parent=1 // pred_check_branch
      %88 = sbr.rel (0) target = $region25
    $region24: #{tpu_custom_call.1} parent=1 // pred_region
      %90 = vsyncadd [#allocation4], 0
      %s92 = sshll.u32 [#allocation7], 4
      %s93 = int_to_ptr.vmem [resolvable:$true] %s92
      %s94 = sshll.u32 %s3, 4
      %s95 = int_to_ptr.hbm [resolvable:$true] %s94
      %97 = dma.vmem_to_hbm [thread:$0]  %s93, 128, %s95, [#allocation4]
    $region25: #{tpu_custom_call.1} parent=1 // pred_fallthru
      _
    // Predicated region
    $region26: #{tpu_custom_call.1} parent=1 // pred_check
      _
    $region27: #{tpu_custom_call.1} parent=1 // pred_check_branch
      %99 = sbr.rel (0) target = $region29
    $region28: #{tpu_custom_call.1} parent=1 // pred_region
      %101 = dma.done [#allocation4], 128
    $region29: #{tpu_custom_call.1} parent=1 // pred_fallthru
      _
    %102 = vsyncpa [#allocation3], 1
    %103 = vsyncpa [#allocation6], 1
    %104 = vsyncpa [#allocation4], 1

</llo_original>
